<compile_context>
chip_gen: v7x
topology: tpu7x:2x2x1
jax: 0.10.0
libtpu: 0.0.40
codegen_flags: <defaults>
</compile_context>

<pallas_src>
import jax
import jax.numpy as jnp
from jax.experimental import pallas as pl
from jax.experimental.pallas import tpu as pltpu


_OUT_LANES = 128  # lane-dense output slab width (value replicated across lanes)


def critic_kernel(x_ref, w1_ref, b1_ref, w2_ref, b2_ref, w3t_ref, b3_ref, out_ref):
    # x_ref : (TB, obs)    w1: (obs, H)   b1: (1, H)
    # w2    : (H, H)       b2: (1, H)
    # w3t   : (1, H)  (transposed final weight)      b3: (1, 1)
    # out_ref: (TB, 128)   value broadcast across lanes; column 0 holds the result
    x = x_ref[...]

    # layer 1: MXU matmul, f32 accumulate, f32 bias + tanh (tanh goes to the EUP slot)
    h1 = jnp.dot(x, w1_ref[...], preferred_element_type=jnp.float32) + b1_ref[...]
    h1 = jnp.tanh(h1)

    # layer 2: MXU matmul (cast activations back to the matmul-operand dtype, e.g. bf16)
    h2 = jnp.dot(h1.astype(w2_ref.dtype), w2_ref[...],
                 preferred_element_type=jnp.float32) + b2_ref[...]
    h2 = jnp.tanh(h2)

    # layer 3 (H -> 1): an N=1 matmul wastes the MXU; use a VPU multiply + XLU lane reduce.
    w3_row = w3t_ref[...].astype(jnp.float32)                        # (1, H)
    v = jnp.sum(h2 * w3_row, axis=-1, keepdims=True) + b3_ref[...]   # (TB, 1)

    # lane-dense store (unmasked vst); wrapper extracts column 0 outside the kernel.
    out_ref[...] = jnp.broadcast_to(v, out_ref.shape).astype(out_ref.dtype)


def critic_forward(x, params, *, block_b=256, compute_dtype=jnp.float32):
    """x: (B, obs) float32 -> value: (B, 1) float32.

    block_b: batch tile (rows per grid step); rounded down to a multiple of 8.
             256+ keeps the MXU M-dimension full on v6e/v7x.
    compute_dtype: dtype of the matmul operands (x, W1, W2). Use jnp.bfloat16 on
             v6e/v7x for higher MXU throughput; accumulation, biases and tanh stay f32.
    """
    w1, b1, w2, b2, w3, b3 = params
    B, obs = x.shape
    H = w1.shape[1]

    # --- batch tiling: tile must be a multiple of 8 (sublanes); pad B up to a full tile ---
    tb = min(int(block_b), pl.cdiv(B, 8) * 8)
    tb = max(8, (tb // 8) * 8)
    b_pad = pl.cdiv(B, tb) * tb
    if b_pad != B:
        x = jnp.pad(x, ((0, b_pad - B), (0, 0)))

    # --- operand dtypes: matmul operands may be bf16; everything else stays f32 ---
    xc = x.astype(compute_dtype)
    w1c = w1.astype(compute_dtype)
    w2c = w2.astype(compute_dtype)
    b1f = b1.reshape(1, H).astype(jnp.float32)
    b2f = b2.reshape(1, H).astype(jnp.float32)
    w3t = w3.reshape(1, H).astype(jnp.float32)   # (H, 1) -> (1, H) for the lane reduction
    b3f = b3.reshape(1, 1).astype(jnp.float32)

    grid = (b_pad // tb,)

    nbytes = lambda a: a.size * a.dtype.itemsize
    cost = pl.CostEstimate(
        flops=2 * b_pad * (obs * H + H * H + H),
        transcendentals=2 * b_pad * H,
        bytes_accessed=(nbytes(xc) + nbytes(w1c) + nbytes(w2c) + nbytes(b1f)
                        + nbytes(b2f) + nbytes(w3t) + nbytes(b3f)
                        + b_pad * _OUT_LANES * 4),
    )

    whole = lambda a: pl.BlockSpec(a.shape, lambda i: (0, 0))   # resident across grid steps

    out_padded = pl.pallas_call(
        critic_kernel,
        out_shape=jax.ShapeDtypeStruct((b_pad, _OUT_LANES), jnp.float32),
        grid=grid,
        in_specs=[
            pl.BlockSpec((tb, obs), lambda i: (i, 0)),   # x: tiled over batch rows
            whole(w1c), whole(b1f),
            whole(w2c), whole(b2f),
            whole(w3t), whole(b3f),
        ],
        out_specs=pl.BlockSpec((tb, _OUT_LANES), lambda i: (i, 0)),
        compiler_params=pltpu.CompilerParams(
            dimension_semantics=("parallel",)),          # batch axis splits across v7x TCs
        cost_estimate=cost,
    )(xc, w1c, b1f, w2c, b2f, w3t, b3f)

    return out_padded[:B, 0:1]


def init_critic_params(key, obs_shape, hidden_num=128):
    """Deterministic init mimicking PyTorch's default Linear init (U(-1/sqrt(fan_in), +))."""
    ks = jax.random.split(key, 6)

    def linear(kw, kb, fan_in, fan_out):
        bound = 1.0 / jnp.sqrt(fan_in)
        w = jax.random.uniform(kw, (fan_in, fan_out), jnp.float32, -bound, bound)
        b = jax.random.uniform(kb, (1, fan_out), jnp.float32, -bound, bound)
        return w, b

    w1, b1 = linear(ks[0], ks[1], obs_shape, hidden_num)
    w2, b2 = linear(ks[2], ks[3], hidden_num, hidden_num)
    w3, b3 = linear(ks[4], ks[5], hidden_num, 1)
    return (w1, b1, w2, b2, w3, b3)


def critic_reference(x, params):
    w1, b1, w2, b2, w3, b3 = params
    h = jnp.tanh(x @ w1 + b1.reshape(1, -1))
    h = jnp.tanh(h @ w2 + b2.reshape(1, -1))
    return h @ w3 + b3.reshape(1, -1)


if __name__ == "__main__":
    obs_shape, hidden_num, batch = 32, 128, 8

    key = jax.random.PRNGKey(0)
    k_params, k_x, k_big = jax.random.split(key, 3)

    params = init_critic_params(k_params, obs_shape, hidden_num)

    # small batch (matches the toy PyTorch usage)
    x = jax.random.normal(k_x, (batch, obs_shape), dtype=jnp.float32)
    value = jax.block_until_ready(critic_forward(x, params))
    ref = critic_reference(x, params)
    assert value.shape == (batch, 1)
    assert jnp.allclose(value, ref, atol=1e-4, rtol=1e-4), "f32 small-batch mismatch"

    # larger, non-tile-aligned batch: exercises the batch grid, pipelining and tail padding
    xb = jax.random.normal(k_big, (1000, obs_shape), dtype=jnp.float32)
    vb = jax.block_until_ready(critic_forward(xb, params, block_b=256))
    refb = critic_reference(xb, params)
    assert vb.shape == (1000, 1)
    assert jnp.allclose(vb, refb, atol=1e-4, rtol=1e-4), "f32 big-batch mismatch"

    # bf16 matmul operands (v6e/v7x fast path): loose-tolerance smoke test
    vbf = jax.block_until_ready(
        critic_forward(xb, params, block_b=256, compute_dtype=jnp.bfloat16))
    assert vbf.shape == (1000, 1)
    assert float(jnp.max(jnp.abs(vbf - refb))) < 0.25, "bf16 path diverged"

    print("KERNEL_OK")
</pallas_src>

<mosaic_0001>
module attributes {stable_mosaic.version = 11 : i64} {
  func.func @critic_kernel(%arg0: i32, %arg1: memref<8x32xf32, #tpu.memory_space<vmem>>, %arg2: memref<32x128xf32, #tpu.memory_space<vmem>>, %arg3: memref<1x128xf32, #tpu.memory_space<vmem>>, %arg4: memref<128x128xf32, #tpu.memory_space<vmem>>, %arg5: memref<1x128xf32, #tpu.memory_space<vmem>>, %arg6: memref<1x128xf32, #tpu.memory_space<vmem>>, %arg7: memref<1x1xf32, #tpu.memory_space<vmem>>, %arg8: memref<8x128xf32, #tpu.memory_space<vmem>>) attributes {dimension_semantics = [#tpu.dimension_semantics<parallel>], iteration_bounds = array<i64: 1>, scalar_prefetch = 0 : i64, scratch_operands = 0 : i64, tpu.core_type = #tpu.core_type<tc>, window_params = [{transform_indices = @transform_0, window_bounds = array<i64: 8, 32>}, {pipeline_mode = #tpu.pipeline_mode<synchronous>, transform_indices = @transform_1, window_bounds = array<i64: 32, 128>}, {pipeline_mode = #tpu.pipeline_mode<synchronous>, transform_indices = @transform_2, window_bounds = array<i64: 1, 128>}, {pipeline_mode = #tpu.pipeline_mode<synchronous>, transform_indices = @transform_3, window_bounds = array<i64: 128, 128>}, {pipeline_mode = #tpu.pipeline_mode<synchronous>, transform_indices = @transform_4, window_bounds = array<i64: 1, 128>}, {pipeline_mode = #tpu.pipeline_mode<synchronous>, transform_indices = @transform_5, window_bounds = array<i64: 1, 128>}, {pipeline_mode = #tpu.pipeline_mode<synchronous>, transform_indices = @transform_6, window_bounds = array<i64: 1, 1>}, {transform_indices = @transform_7, window_bounds = array<i64: 8, 128>}]} {
    %c0 = arith.constant 0 : index
    %c0_0 = arith.constant 0 : index
    %0 = vector.load %arg1[%c0, %c0_0] : memref<8x32xf32, #tpu.memory_space<vmem>>, vector<8x32xf32>
    %c0_1 = arith.constant 0 : index
    %c0_2 = arith.constant 0 : index
    %1 = vector.load %arg2[%c0_1, %c0_2] : memref<32x128xf32, #tpu.memory_space<vmem>>, vector<32x128xf32>
    %cst = arith.constant dense<0.000000e+00> : vector<8x128xf32>
    %2 = tpu.matmul %0, %1, %cst {dimension_numbers = #tpu.dot_dimension_numbers<[1], [0], [0], [1], [0, 0, 1, 1], [], []>} : vector<8x32xf32>, vector<32x128xf32>, vector<8x128xf32> -> vector<8x128xf32>
    %c0_3 = arith.constant 0 : index
    %c0_4 = arith.constant 0 : index
    %3 = vector.load %arg3[%c0_3, %c0_4] : memref<1x128xf32, #tpu.memory_space<vmem>>, vector<1x128xf32>
    %4 = vector.broadcast %3 : vector<1x128xf32> to vector<8x128xf32>
    %5 = arith.addf %2, %4 : vector<8x128xf32>
    %6 = math.tanh %5 : vector<8x128xf32>
    %c0_5 = arith.constant 0 : index
    %c0_6 = arith.constant 0 : index
    %7 = vector.load %arg4[%c0_5, %c0_6] : memref<128x128xf32, #tpu.memory_space<vmem>>, vector<128x128xf32>
    %cst_7 = arith.constant dense<0.000000e+00> : vector<8x128xf32>
    %8 = tpu.matmul %6, %7, %cst_7 {dimension_numbers = #tpu.dot_dimension_numbers<[1], [0], [0], [1], [0, 0, 1, 1], [], []>} : vector<8x128xf32>, vector<128x128xf32>, vector<8x128xf32> -> vector<8x128xf32>
    %c0_8 = arith.constant 0 : index
    %c0_9 = arith.constant 0 : index
    %9 = vector.load %arg5[%c0_8, %c0_9] : memref<1x128xf32, #tpu.memory_space<vmem>>, vector<1x128xf32>
    %10 = vector.broadcast %9 : vector<1x128xf32> to vector<8x128xf32>
    %11 = arith.addf %8, %10 : vector<8x128xf32>
    %12 = math.tanh %11 : vector<8x128xf32>
    %c0_10 = arith.constant 0 : index
    %c0_11 = arith.constant 0 : index
    %13 = vector.load %arg6[%c0_10, %c0_11] : memref<1x128xf32, #tpu.memory_space<vmem>>, vector<1x128xf32>
    %14 = vector.broadcast %13 : vector<1x128xf32> to vector<8x128xf32>
    %15 = arith.mulf %12, %14 : vector<8x128xf32>
    %cst_12 = arith.constant dense<0.000000e+00> : vector<8xf32>
    %16 = vector.multi_reduction <add>, %15, %cst_12 [1] : vector<8x128xf32> to vector<8xf32>
    %17 = vector.shape_cast %16 : vector<8xf32> to vector<8x1xf32>
    %c0_13 = arith.constant 0 : index
    %c0_14 = arith.constant 0 : index
    %18 = vector.load %arg7[%c0_13, %c0_14] : memref<1x1xf32, #tpu.memory_space<vmem>>, vector<1x1xf32>
    %19 = vector.broadcast %18 : vector<1x1xf32> to vector<8x1xf32>
    %20 = arith.addf %17, %19 : vector<8x1xf32>
    %21 = vector.shape_cast %20 : vector<8x1xf32> to vector<8x1xf32>
    %22 = vector.broadcast %21 : vector<8x1xf32> to vector<8x128xf32>
    %c0_15 = arith.constant 0 : index
    %c0_16 = arith.constant 0 : index
    %23 = vector.load %arg8[%c0_15, %c0_16] : memref<8x128xf32, #tpu.memory_space<vmem>>, vector<8x128xf32>
    tpu.vector_store %arg8[%c0_15, %c0_16], %22 {strides = array<i32>} : memref<8x128xf32, #tpu.memory_space<vmem>>, vector<8x128xf32>,
    return
  }
  func.func @transform_0(%arg0: i32) -> (i32, i32) {
    %c0_i32 = arith.constant 0 : i32
    %c0_i32_0 = arith.constant 0 : i32
    return %arg0, %c0_i32 : i32, i32
  }
  func.func @transform_1(%arg0: i32) -> (i32, i32) {
    %c0_i32 = arith.constant 0 : i32
    %c0_i32_0 = arith.constant 0 : i32
    %c0_i32_1 = arith.constant 0 : i32
    return %c0_i32, %c0_i32_0 : i32, i32
  }
  func.func @transform_2(%arg0: i32) -> (i32, i32) {
    %c0_i32 = arith.constant 0 : i32
    %c0_i32_0 = arith.constant 0 : i32
    %c0_i32_1 = arith.constant 0 : i32
    return %c0_i32, %c0_i32_0 : i32, i32
  }
  func.func @transform_3(%arg0: i32) -> (i32, i32) {
    %c0_i32 = arith.constant 0 : i32
    %c0_i32_0 = arith.constant 0 : i32
    %c0_i32_1 = arith.constant 0 : i32
    return %c0_i32, %c0_i32_0 : i32, i32
  }
  func.func @transform_4(%arg0: i32) -> (i32, i32) {
    %c0_i32 = arith.constant 0 : i32
    %c0_i32_0 = arith.constant 0 : i32
    %c0_i32_1 = arith.constant 0 : i32
    return %c0_i32, %c0_i32_0 : i32, i32
  }
  func.func @transform_5(%arg0: i32) -> (i32, i32) {
    %c0_i32 = arith.constant 0 : i32
    %c0_i32_0 = arith.constant 0 : i32
    %c0_i32_1 = arith.constant 0 : i32
    return %c0_i32, %c0_i32_0 : i32, i32
  }
  func.func @transform_6(%arg0: i32) -> (i32, i32) {
    %c0_i32 = arith.constant 0 : i32
    %c0_i32_0 = arith.constant 0 : i32
    %c0_i32_1 = arith.constant 0 : i32
    return %c0_i32, %c0_i32_0 : i32, i32
  }
  func.func @transform_7(%arg0: i32) -> (i32, i32) {
    %c0_i32 = arith.constant 0 : i32
    %c0_i32_0 = arith.constant 0 : i32
    return %arg0, %c0_i32 : i32, i32
  }
}

</mosaic_0001>

<llo_original>
// kernel: tpu_custom_call.1
$region0: #{tpu_custom_call.1}
  #allocation0 [shape = 'u32[]', space=smem, size = 0x4, offset = 0x4, fixed_abs, tag = 'smem constant byte address 0x4 - core index']
  #allocation1 [shape = 'u32[144,128]{1,0:T(1,128)}', space=vmem, size = 0x12000, scoped, tag = 'internal scratch']
  #allocation2 [shape = 'f32[1,1]{1,0:T(1,128)S(1)}', space=vmem, size = 0x200, scoped, tag = 'scoped memory for tpu_custom_call.1']
  %s0 = inlined_call_operand.hbm [shape: f32[8,32], index: 0, kind: input, shape index: {}]
  %s1 = inlined_call_operand.hbm [shape: f32[32,128], index: 1, kind: input, shape index: {}]
  %s2 = inlined_call_operand.vmem [shape: f32[1,128], index: 2, kind: input, shape index: {}]
  %s3 = inlined_call_operand.hbm [shape: f32[128,128], index: 3, kind: input, shape index: {}]
  %s4 = inlined_call_operand.vmem [shape: f32[1,128], index: 4, kind: input, shape index: {}]
  %s5 = inlined_call_operand.vmem [shape: f32[1,128], index: 5, kind: input, shape index: {}]
  %s6 = inlined_call_operand.<no memory space> [shape: f32[1,1], index: 6, kind: input, shape index: {}]
  %s7 = inlined_call_operand.hbm [shape: f32[8,128], index: 7, kind: output, shape index: {}]
  %s8 = sld [smem:[#allocation0]]
  $region50: #{tpu_custom_call.1} parent=0
    _
  %s10 = ssub.s32 1, %s8
  %s11 = scalar_select 0, %s10, %s8
  %v12 = vstv %s6
  %13 = vst [vmem:[#allocation2] sm:$0x1] %v12
  $region1: #{tpu_custom_call.1} parent=0
    #allocation3 [shape = 'u8[4096]{0}', space=vmem, size = 0x1000, scoped, tag = 'input window, operand 0, single buffered']
    #allocation4 [shape = 's32[1]{0}', space=sflag, size = 0x4, scoped, tag = 'scoped memory for tpu_custom_call.1']
    #allocation5 [shape = 's32[1]{0}', space=sflag, size = 0x4, scoped, tag = 'scoped memory for tpu_custom_call.1']
    #allocation6 [shape = 'u8[16384]{0}', space=vmem, size = 0x4000, scoped, tag = 'input window, operand 1, single buffered']
    #allocation7 [shape = 's32[1]{0}', space=sflag, size = 0x4, scoped, tag = 'scoped memory for tpu_custom_call.1']
    #allocation8 [shape = 'u8[65536]{0}', space=vmem, size = 0x10000, scoped, tag = 'input window, operand 3, single buffered']
    #allocation9 [shape = 'u8[4096]{0}', space=vmem, size = 0x1000, scoped, tag = 'output window, operand 0, single buffered']
    %14 = vsyncpa [#allocation4], 0
    %15 = vsyncpa [#allocation7], 0
    %16 = vsyncpa [#allocation5], 0
    // Predicated region
    $region2: #{tpu_custom_call.1} parent=1 // pred_check
      _
    $region3: #{tpu_custom_call.1} parent=1 // pred_check_branch
      %18 = sbr.rel (0) target = $region5
    $region4: #{tpu_custom_call.1} parent=1 // pred_region
      %s20 = ssub.s32 128, 128
      %21 = vsyncadd [#allocation4], %s20
      %s23 = sshll.u32 [#allocation3], 4
      %s24 = int_to_ptr.vmem [resolvable:$true] %s23
      %26 = dma.hbm_to_vmem [thread:$0]  %s0, 128, %s24, [#allocation4]
    $region5: #{tpu_custom_call.1} parent=1 // pred_fallthru
      _
    // Predicated region
    $region6: #{tpu_custom_call.1} parent=1 // pred_check
      _
    $region7: #{tpu_custom_call.1} parent=1 // pred_check_branch
      %28 = sbr.rel (0) target = $region9
    $region8: #{tpu_custom_call.1} parent=1 // pred_region
      %s30 = ssub.s32 512, 512
      %31 = vsyncadd [#allocation7], %s30
      %s32 = sshll.u32 [#allocation6], 4
      %s33 = int_to_ptr.vmem [resolvable:$true] %s32
      %38 = dma.hbm_to_vmem [thread:$0]  %s1, 512, %s33, [#allocation7], 128, 128, 8
    $region9: #{tpu_custom_call.1} parent=1 // pred_fallthru
      _
    // Predicated region
    $region10: #{tpu_custom_call.1} parent=1 // pred_check
      _
    $region11: #{tpu_custom_call.1} parent=1 // pred_check_branch
      %40 = sbr.rel (0) target = $region13
    $region12: #{tpu_custom_call.1} parent=1 // pred_region
      _
    $region13: #{tpu_custom_call.1} parent=1 // pred_fallthru
      _
    // Predicated region
    $region14: #{tpu_custom_call.1} parent=1 // pred_check
      _
    $region15: #{tpu_custom_call.1} parent=1 // pred_check_branch
      %42 = sbr.rel (0) target = $region17
    $region16: #{tpu_custom_call.1} parent=1 // pred_region
      %s44 = ssub.s32 2048, 2048
      %45 = vsyncadd [#allocation7], %s44
      %s46 = sshll.u32 [#allocation8], 4
      %s47 = int_to_ptr.vmem [resolvable:$true] %s46
      %52 = dma.hbm_to_vmem [thread:$0]  %s3, 2048, %s47, [#allocation7], 128, 128, 8
    $region17: #{tpu_custom_call.1} parent=1 // pred_fallthru
      _
    // Predicated region
    $region18: #{tpu_custom_call.1} parent=1 // pred_check
      _
    $region19: #{tpu_custom_call.1} parent=1 // pred_check_branch
      %54 = sbr.rel (0) target = $region21
    $region20: #{tpu_custom_call.1} parent=1 // pred_region
      _
    $region21: #{tpu_custom_call.1} parent=1 // pred_fallthru
      _
    // Predicated region
    $region22: #{tpu_custom_call.1} parent=1 // pred_check
      _
    $region23: #{tpu_custom_call.1} parent=1 // pred_check_branch
      %56 = sbr.rel (0) target = $region25
    $region24: #{tpu_custom_call.1} parent=1 // pred_region
      _
    $region25: #{tpu_custom_call.1} parent=1 // pred_fallthru
      _
    // Predicated region
    $region26: #{tpu_custom_call.1} parent=1 // pred_check
      _
    $region27: #{tpu_custom_call.1} parent=1 // pred_check_branch
      %58 = sbr.rel (0) target = $region29
    $region28: #{tpu_custom_call.1} parent=1 // pred_region
      _
    $region29: #{tpu_custom_call.1} parent=1 // pred_fallthru
      _
    // Predicated region
    $region30: #{tpu_custom_call.1} parent=1 // pred_check
      _
    $region31: #{tpu_custom_call.1} parent=1 // pred_check_branch
      %60 = sbr.rel (0) target = $region33
    $region32: #{tpu_custom_call.1} parent=1 // pred_region
      %61 = dma.done [#allocation4], 128
    $region33: #{tpu_custom_call.1} parent=1 // pred_fallthru
      _
    // Predicated region
    $region34: #{tpu_custom_call.1} parent=1 // pred_check
      _
    $region35: #{tpu_custom_call.1} parent=1 // pred_check_branch
      %63 = sbr.rel (0) target = $region37
    $region36: #{tpu_custom_call.1} parent=1 // pred_region
      %64 = dma.done [#allocation7], 512
    $region37: #{tpu_custom_call.1} parent=1 // pred_fallthru
      _
    // Predicated region
    $region38: #{tpu_custom_call.1} parent=1 // pred_check
      _
    $region39: #{tpu_custom_call.1} parent=1 // pred_check_branch
      %66 = sbr.rel (0) target = $region41
    $region40: #{tpu_custom_call.1} parent=1 // pred_region
      %67 = dma.done [#allocation7], 2048
    $region41: #{tpu_custom_call.1} parent=1 // pred_fallthru
      _
    %v68 = vld [vmem:[#allocation3] sm:$0xff]
    %v69 = vld [vmem:[#allocation6] sm:$0xff]
    %v70 = vld [vmem:[#allocation6 + $0x8] sm:$0xff]
    %v71 = vld [vmem:[#allocation6 + $0x10] sm:$0xff]
    %v72 = vld [vmem:[#allocation6 + $0x18] sm:$0xff]
    %v73 = vld [vmem:[%s2] sm:$0x1]
    %v75 = vlaneseq
    %v76 = vshrl.u32 %v75, 7
    %v77 = vsub.s32 0, %v76
    %v78 = vrot.slane %v73, %v77
    %vm80 = vcmask 261120
    %v82 = vsel %vm80, %v68, 0
    %84 = vmatprep.subr.mxu0 0.0
    %85 = vmatpush1.msra.mxu0 %v69
    %86 = vmatprep.subr.mxu0 0.0
    %87 = vmatpush1.msra.mxu0 %v70
    %88 = vmatprep.subr.mxu0 0.0
    %89 = vmatpush1.msra.mxu0 %v71
    %90 = vmatprep.subr.mxu0 0.0
    %91 = vmatpush1.msra.mxu0 %v72
    %92 = vmatprep.subr.mxu0 0.0
    %93 = vmatpush1.msra.mxu0 0.0
    %94 = vmatprep.subr.mxu0 0.0
    %95 = vmatpush1.msra.mxu0 0.0
    %96 = vmatprep.subr.mxu0 0.0
    %97 = vmatpush1.msra.mxu0 0.0
    %98 = vmatprep.subr.mxu0 0.0
    %99 = vmatpush1.msra.mxu0 0.0
    %100 = vmatprep.subr.mxu0 0.0
    %101 = vmatpush1.msra.mxu0 0.0
    %102 = vmatprep.subr.mxu0 0.0
    %103 = vmatpush1.msra.mxu0 0.0
    %104 = vmatprep.subr.mxu0 0.0
    %105 = vmatpush1.msra.mxu0 0.0
    %106 = vmatprep.subr.mxu0 0.0
    %107 = vmatpush1.msra.mxu0 0.0
    %108 = vmatprep.subr.mxu0 0.0
    %109 = vmatpush1.msra.mxu0 0.0
    %110 = vmatprep.subr.mxu0 0.0
    %111 = vmatpush1.msra.mxu0 0.0
    %112 = vmatprep.subr.mxu0 0.0
    %113 = vmatpush1.msra.mxu0 0.0
    %114 = vmatprep.subr.mxu0 0.0
    %115 = vmatpush1.msra.mxu0 0.0
    %116 = vmatprep.subr.mxu0 0.0
    %117 = vmatpush1.msra.mxu0 0.0
    %118 = vmatprep.subr.mxu0 0.0
    %119 = vmatpush1.msra.mxu0 0.0
    %120 = vmatprep.subr.mxu0 0.0
    %121 = vmatpush1.msra.mxu0 0.0
    %122 = vmatprep.subr.mxu0 0.0
    %123 = vmatpush1.msra.mxu0 0.0
    %124 = vmatprep.subr.mxu0 0.0
    %125 = vmatpush1.msra.mxu0 0.0
    %126 = vmatprep.subr.mxu0 0.0
    %127 = vmatpush1.msra.mxu0 0.0
    %128 = vmatprep.subr.mxu0 0.0
    %129 = vmatpush1.msra.mxu0 0.0
    %130 = vmatprep.subr.mxu0 0.0
    %131 = vmatpush1.msra.mxu0 0.0
    %132 = vmatprep.subr.mxu0 0.0
    %133 = vmatpush1.msra.mxu0 0.0
    %134 = vmatprep.subr.mxu0 0.0
    %135 = vmatpush1.msra.mxu0 0.0
    %136 = vmatprep.subr.mxu0 0.0
    %137 = vmatpush1.msra.mxu0 0.0
    %138 = vmatprep.subr.mxu0 0.0
    %139 = vmatpush1.msra.mxu0 0.0
    %140 = vmatprep.subr.mxu0 0.0
    %141 = vmatpush1.msra.mxu0 0.0
    %142 = vmatprep.subr.mxu0 0.0
    %143 = vmatpush1.msra.mxu0 0.0
    %144 = vmatprep.subr.mxu0 0.0
    %145 = vmatpush1.msra.mxu0 0.0
    %146 = vmatprep.subr.mxu0 0.0
    %147 = vmatpush1.msra.mxu0 0.0
    %148 = vmatprep.mubr.f32.mxu0 0.0
    %149 = vmatmul.mubr.f32.gmra.mrb[0].mxu0 %v82
    %v150 = vpop.f32.mrb[0].mxu0
    %v151 = vadd.f32 %v78, %v150
    %v152 = vpop.f32.mrb[0].mxu0
    %153 = vdwg.mxu0
    %v154 = vtanh.pop %v151
    %v155 = vld [vmem:[#allocation8] sm:$0xff]
    %v156 = vld [vmem:[#allocation8 + $0x8] sm:$0xff]
    %v157 = vld [vmem:[#allocation8 + $0x10] sm:$0xff]
    %v158 = vld [vmem:[#allocation8 + $0x18] sm:$0xff]
    %v159 = vld [vmem:[#allocation8 + $0x20] sm:$0xff]
    %v160 = vld [vmem:[#allocation8 + $0x28] sm:$0xff]
    %v161 = vld [vmem:[#allocation8 + $0x30] sm:$0xff]
    %v162 = vld [vmem:[#allocation8 + $0x38] sm:$0xff]
    %v163 = vld [vmem:[#allocation8 + $0x40] sm:$0xff]
    %v164 = vld [vmem:[#allocation8 + $0x48] sm:$0xff]
    %v165 = vld [vmem:[#allocation8 + $0x50] sm:$0xff]
    %v166 = vld [vmem:[#allocation8 + $0x58] sm:$0xff]
    %v167 = vld [vmem:[#allocation8 + $0x60] sm:$0xff]
    %v168 = vld [vmem:[#allocation8 + $0x68] sm:$0xff]
    %v169 = vld [vmem:[#allocation8 + $0x70] sm:$0xff]
    %v170 = vld [vmem:[#allocation8 + $0x78] sm:$0xff]
    %v171 = vld [vmem:[%s4] sm:$0x1]
    %v173 = vlaneseq
    %v174 = vshrl.u32 %v173, 7
    %v175 = vsub.s32 0, %v174
    %v176 = vrot.slane %v171, %v175
    %178 = vmatprep.subr.mxu0 0.0
    %179 = vmatpush1.msra.mxu0 %v155
    %180 = vmatprep.subr.mxu0 0.0
    %181 = vmatpush1.msra.mxu0 %v156
    %182 = vmatprep.subr.mxu0 0.0
    %183 = vmatpush1.msra.mxu0 %v157
    %184 = vmatprep.subr.mxu0 0.0
    %185 = vmatpush1.msra.mxu0 %v158
    %186 = vmatprep.subr.mxu0 0.0
    %187 = vmatpush1.msra.mxu0 %v159
    %188 = vmatprep.subr.mxu0 0.0
    %189 = vmatpush1.msra.mxu0 %v160
    %190 = vmatprep.subr.mxu0 0.0
    %191 = vmatpush1.msra.mxu0 %v161
    %192 = vmatprep.subr.mxu0 0.0
    %193 = vmatpush1.msra.mxu0 %v162
    %194 = vmatprep.subr.mxu0 0.0
    %195 = vmatpush1.msra.mxu0 %v163
    %196 = vmatprep.subr.mxu0 0.0
    %197 = vmatpush1.msra.mxu0 %v164
    %198 = vmatprep.subr.mxu0 0.0
    %199 = vmatpush1.msra.mxu0 %v165
    %200 = vmatprep.subr.mxu0 0.0
    %201 = vmatpush1.msra.mxu0 %v166
    %202 = vmatprep.subr.mxu0 0.0
    %203 = vmatpush1.msra.mxu0 %v167
    %204 = vmatprep.subr.mxu0 0.0
    %205 = vmatpush1.msra.mxu0 %v168
    %206 = vmatprep.subr.mxu0 0.0
    %207 = vmatpush1.msra.mxu0 %v169
    %208 = vmatprep.subr.mxu0 0.0
    %209 = vmatpush1.msra.mxu0 %v170
    %210 = vmatprep.subr.mxu0 0.0
    %211 = vmatpush1.msra.mxu0 0.0
    %212 = vmatprep.subr.mxu0 0.0
    %213 = vmatpush1.msra.mxu0 0.0
    %214 = vmatprep.subr.mxu0 0.0
    %215 = vmatpush1.msra.mxu0 0.0
    %216 = vmatprep.subr.mxu0 0.0
    %217 = vmatpush1.msra.mxu0 0.0
    %218 = vmatprep.subr.mxu0 0.0
    %219 = vmatpush1.msra.mxu0 0.0
    %220 = vmatprep.subr.mxu0 0.0
    %221 = vmatpush1.msra.mxu0 0.0
    %222 = vmatprep.subr.mxu0 0.0
    %223 = vmatpush1.msra.mxu0 0.0
    %224 = vmatprep.subr.mxu0 0.0
    %225 = vmatpush1.msra.mxu0 0.0
    %226 = vmatprep.subr.mxu0 0.0
    %227 = vmatpush1.msra.mxu0 0.0
    %228 = vmatprep.subr.mxu0 0.0
    %229 = vmatpush1.msra.mxu0 0.0
    %230 = vmatprep.subr.mxu0 0.0
    %231 = vmatpush1.msra.mxu0 0.0
    %232 = vmatprep.subr.mxu0 0.0
    %233 = vmatpush1.msra.mxu0 0.0
    %234 = vmatprep.subr.mxu0 0.0
    %235 = vmatpush1.msra.mxu0 0.0
    %236 = vmatprep.subr.mxu0 0.0
    %237 = vmatpush1.msra.mxu0 0.0
    %238 = vmatprep.subr.mxu0 0.0
    %239 = vmatpush1.msra.mxu0 0.0
    %240 = vmatprep.subr.mxu0 0.0
    %241 = vmatpush1.msra.mxu0 0.0
    %242 = vmatprep.mubr.f32.mxu0 0.0
    %243 = vmatmul.mubr.f32.gmra.mrb[0].mxu0 %v154
    %v244 = vpop.f32.mrb[0].mxu0
    %v245 = vadd.f32 %v176, %v244
    %v246 = vpop.f32.mrb[0].mxu0
    %247 = vdwg.mxu0
    %v248 = vtanh.pop %v245
    %v249 = vld [vmem:[%s5] sm:$0x1]
    %v251 = vlaneseq
    %v252 = vshrl.u32 %v251, 7
    %v253 = vsub.s32 0, %v252
    %v254 = vrot.slane %v249, %v253
    %v256 = vmul.f32 %v248, %v254
    %257 = vadd.xlane.f32.xlu0 %v256
    %v258 = vpop.xlane.xlu0 %257
    %v259 = vld [vmem:[#allocation2] sm:$0x1]
    %v261 = vlaneseq
    %v262 = vshrl.u32 %v261, 7
    %v263 = vsub.s32 0, %v262
    %v264 = vrot.slane %v259, %v263
    %v266 = vadd.f32 %v258, %v264
    %268 = vset.pattern.permute.xlu0 0
    %269 = vperm.xlu0 %268, %v266
    %v270 = vpop.permute.xlu0 %269
    %272 = vst [vmem:[#allocation9] sm:$0xff] %v270
    // Predicated region
    $region42: #{tpu_custom_call.1} parent=1 // pred_check
      _
    $region43: #{tpu_custom_call.1} parent=1 // pred_check_branch
      %274 = sbr.rel (0) target = $region45
    $region44: #{tpu_custom_call.1} parent=1 // pred_region
      %s276 = ssub.s32 128, 128
      %277 = vsyncadd [#allocation5], %s276
      %s279 = sshll.u32 [#allocation9], 4
      %s280 = int_to_ptr.vmem [resolvable:$true] %s279
      %282 = dma.vmem_to_hbm [thread:$0]  %s280, 128, %s7, [#allocation5]
    $region45: #{tpu_custom_call.1} parent=1 // pred_fallthru
      _
    // Predicated region
    $region46: #{tpu_custom_call.1} parent=1 // pred_check
      _
    $region47: #{tpu_custom_call.1} parent=1 // pred_check_branch
      %284 = sbr.rel (0) target = $region49
    $region48: #{tpu_custom_call.1} parent=1 // pred_region
      %285 = dma.done [#allocation5], 128
    $region49: #{tpu_custom_call.1} parent=1 // pred_fallthru
      _
    %286 = vsyncpa [#allocation4], 1
    %287 = vsyncpa [#allocation7], 1
    %288 = vsyncpa [#allocation5], 1

</llo_original>
